<compile_context>
chip_gen: v6e
topology: v6e:2x2x1
jax: 0.10.0
libtpu: 0.0.40
codegen_flags: <defaults>
</compile_context>

<pallas_src>
import jax
import jax.numpy as jnp
from jax.experimental import pallas as pl
from jax.experimental.pallas import tpu as pltpu

_VMEM_LIMIT_BYTES = 32 * 1024 * 1024   # safe on v5e/v6e/v7x scoped VMEM
_VMEM_TILE_BUDGET = 24 * 1024 * 1024   # headroom for 2x(2 in + 1 out) buffers


def _squared_modulus_kernel(r_ref, i_ref, o_ref):
    # r_ref/i_ref/o_ref: (1, C, TW).  Pure VPU: square + add, no slicing.
    r = r_ref[...].astype(jnp.float32)
    im = i_ref[...].astype(jnp.float32)
    o_ref[...] = (r * r + im * im).astype(o_ref.dtype)


def _squared_modulus_kernel_fullw(x_ref, o_ref):
    # Fallback for W not a multiple of 128.
    # x_ref: (1, C, 2W) with real in [:, :, :W] and imag in [:, :, W:].
    w = o_ref.shape[-1]
    x = x_ref[...].astype(jnp.float32)
    r = x[:, :, :w]
    im = x[:, :, w:]
    o_ref[...] = (r * r + im * im).astype(o_ref.dtype)


def _pick_lane_tile(w: int, c: int, itemsize: int) -> int:
    """Largest lane tile (multiple of 128) dividing W that fits the VMEM budget."""
    for tw in (2048, 1024, 512, 256, 128):
        if w % tw == 0 and 6 * c * tw * itemsize <= _VMEM_TILE_BUDGET:
            return tw
    return 0


def squared_modulus(x: jax.Array) -> jax.Array:
    """x: (N, 2C, W) -> (N, C, W), out = real^2 + imag^2 per complex channel."""
    n, c2, w = x.shape
    assert c2 % 2 == 0, "channel dim must be even (alternating real/imag)"
    c = c2 // 2

    # Free contiguous reshape: row c = [real_c (W) | imag_c (W)].
    x_r = x.reshape(n, c, 2 * w)
    itemsize = jnp.dtype(x.dtype).itemsize
    out_shape = jax.ShapeDtypeStruct((n, c, w), x.dtype)

    tw = _pick_lane_tile(w, c, itemsize) if (w % 128 == 0) else 0

    if tw:
        nwt = w // tw  # number of W tiles (also the block offset of the imag half)
        return pl.pallas_call(
            _squared_modulus_kernel,
            out_shape=out_shape,
            grid_spec=pltpu.PrefetchScalarGridSpec(
                num_scalar_prefetch=0,
                grid=(n, nwt),
                in_specs=[
                    # real half: blocks [0, nwt) of the (C, 2W) rows
                    pl.BlockSpec((1, c, tw), lambda i, j: (i, 0, j)),
                    # imag half: blocks [nwt, 2*nwt)
                    pl.BlockSpec((1, c, tw),
                                 lambda i, j, _nwt=nwt: (i, 0, j + _nwt)),
                ],
                out_specs=pl.BlockSpec((1, c, tw), lambda i, j: (i, 0, j)),
            ),
            compiler_params=pltpu.CompilerParams(
                dimension_semantics=("parallel", "parallel"),
                vmem_limit_bytes=_VMEM_LIMIT_BYTES,
            ),
        )(x_r, x_r)

    # Fallback: W not lane-aligned -> full-width block, split with lane slices.
    return pl.pallas_call(
        _squared_modulus_kernel_fullw,
        out_shape=out_shape,
        grid_spec=pltpu.PrefetchScalarGridSpec(
            num_scalar_prefetch=0,
            grid=(n,),
            in_specs=[pl.BlockSpec((1, c, 2 * w), lambda i: (i, 0, 0))],
            out_specs=pl.BlockSpec((1, c, w), lambda i: (i, 0, 0)),
        ),
        compiler_params=pltpu.CompilerParams(
            dimension_semantics=("parallel",),
            vmem_limit_bytes=_VMEM_LIMIT_BYTES,
        ),
    )(x_r)


if __name__ == "__main__":
    key = jax.random.PRNGKey(0)
    N, C, W = 2, 4, 256            # 2C = 8 interleaved real/imag channels; W lane-aligned
    x = jax.random.normal(key, (N, 2 * C, W), dtype=jnp.float32)

    out = jax.block_until_ready(squared_modulus(x))

    # pure-JAX reference (mirrors the PyTorch forward exactly)
    xt = jnp.transpose(x, (0, 2, 1))                       # (N, W, 2C)
    pooled = (xt ** 2).reshape(N, W, C, 2).mean(axis=-1)   # AvgPool1d(k=2, s=2)
    ref = jnp.transpose(2.0 * pooled, (0, 2, 1))           # (N, C, W)

    assert out.shape == (N, C, W), out.shape
    assert jnp.allclose(out, ref, atol=1e-6, rtol=1e-6), "mismatch vs reference"
    print("KERNEL_OK")
</pallas_src>

<mosaic_0001>
module attributes {stable_mosaic.version = 11 : i64} {
  func.func @_squared_modulus_kernel(%arg0: i32, %arg1: i32, %arg2: memref<1x4x256xf32, #tpu.memory_space<vmem>>, %arg3: memref<1x4x256xf32, #tpu.memory_space<vmem>>, %arg4: memref<1x4x256xf32, #tpu.memory_space<vmem>>) attributes {dimension_semantics = [#tpu.dimension_semantics<parallel>, #tpu.dimension_semantics<parallel>], iteration_bounds = array<i64: 2, 1>, scalar_prefetch = 0 : i64, scratch_operands = 0 : i64, tpu.core_type = #tpu.core_type<tc>, window_params = [{transform_indices = @transform_0, window_bounds = array<i64: 1, 4, 256>}, {transform_indices = @transform_1, window_bounds = array<i64: 1, 4, 256>}, {transform_indices = @transform_2, window_bounds = array<i64: 1, 4, 256>}]} {
    %c0 = arith.constant 0 : index
    %c0_0 = arith.constant 0 : index
    %c0_1 = arith.constant 0 : index
    %0 = vector.load %arg2[%c0, %c0_0, %c0_1] : memref<1x4x256xf32, #tpu.memory_space<vmem>>, vector<1x4x256xf32>
    %c0_2 = arith.constant 0 : index
    %c0_3 = arith.constant 0 : index
    %c0_4 = arith.constant 0 : index
    %1 = vector.load %arg3[%c0_2, %c0_3, %c0_4] : memref<1x4x256xf32, #tpu.memory_space<vmem>>, vector<1x4x256xf32>
    %2 = arith.mulf %0, %0 : vector<1x4x256xf32>
    %3 = arith.mulf %1, %1 : vector<1x4x256xf32>
    %4 = arith.addf %2, %3 : vector<1x4x256xf32>
    %c0_5 = arith.constant 0 : index
    %c0_6 = arith.constant 0 : index
    %c0_7 = arith.constant 0 : index
    %5 = vector.load %arg4[%c0_5, %c0_6, %c0_7] : memref<1x4x256xf32, #tpu.memory_space<vmem>>, vector<1x4x256xf32>
    tpu.vector_store %arg4[%c0_5, %c0_6, %c0_7], %4 {strides = array<i32>} : memref<1x4x256xf32, #tpu.memory_space<vmem>>, vector<1x4x256xf32>,
    return
  }
  func.func @transform_0(%arg0: i32, %arg1: i32) -> (i32, i32, i32) {
    %c0_i32 = arith.constant 0 : i32
    %c0_i32_0 = arith.constant 0 : i32
    return %arg0, %c0_i32, %arg1 : i32, i32, i32
  }
  func.func @transform_1(%arg0: i32, %arg1: i32) -> (i32, i32, i32) {
    %c1_i32 = arith.constant 1 : i32
    %0 = arith.addi %arg1, %c1_i32 : i32
    %c0_i32 = arith.constant 0 : i32
    %c0_i32_0 = arith.constant 0 : i32
    return %arg0, %c0_i32, %0 : i32, i32, i32
  }
  func.func @transform_2(%arg0: i32, %arg1: i32) -> (i32, i32, i32) {
    %c0_i32 = arith.constant 0 : i32
    %c0_i32_0 = arith.constant 0 : i32
    return %arg0, %c0_i32, %arg1 : i32, i32, i32
  }
}

</mosaic_0001>

<llo_original>
// kernel: tpu_custom_call.1
$region0: #{tpu_custom_call.1}
  #allocation0 [shape = 'u32[]', space=smem, size = 0x4, offset = 0x4, fixed_abs, tag = 'smem constant byte address 0x4 - core index']
  #allocation1 [shape = 'u32[144,128]{1,0:T(1,128)}', space=vmem, size = 0x12000, scoped, tag = 'internal scratch']
  %s0 = inlined_call_operand.hbm [shape: f32[2,4,512], index: 0, kind: input, shape index: {}]
  %s1 = inlined_call_operand.hbm [shape: f32[2,4,512], index: 1, kind: input, shape index: {}]
  %s2 = inlined_call_operand.hbm [shape: f32[2,4,256], index: 2, kind: output, shape index: {}]
  %s3 = sld [smem:[#allocation0]]
  $region49: #{tpu_custom_call.1} parent=0
    _
  %s5 = ssub.s32 1, %s3
  %s6 = scalar_select 0, %s5, %s3
  $region1: #{tpu_custom_call.1} parent=0
    #allocation2 [shape = 'u8[8192]{0}', space=vmem, size = 0x2000, scoped, tag = 'input window, operand 0']
    #allocation3 [shape = 's32[2]{0}', space=sflag, size = 0x8, scoped, tag = 'scoped memory for tpu_custom_call.1']
    #allocation4 [shape = 's32[2]{0}', space=sflag, size = 0x8, scoped, tag = 'scoped memory for tpu_custom_call.1']
    #allocation5 [shape = 'u8[8192]{0}', space=vmem, size = 0x2000, scoped, tag = 'input window, operand 1']
    #allocation6 [shape = 's32[2]{0}', space=sflag, size = 0x8, scoped, tag = 'scoped memory for tpu_custom_call.1']
    #allocation7 [shape = 'u8[8192]{0}', space=vmem, size = 0x2000, scoped, tag = 'output window, operand 0']
    %7 = vsyncpa [#allocation3], 0
    %s8 = scalar_lea.sflag [#allocation3], 1
    %9 = vsyncpa %s8, 0
    %10 = vsyncpa [#allocation6], 0
    %s11 = scalar_lea.sflag [#allocation6], 1
    %12 = vsyncpa %s11, 0
    %13 = vsyncpa [#allocation4], 0
    %s14 = scalar_lea.sflag [#allocation4], 1
    %15 = vsyncpa %s14, 0
    loop: start=0, step=1, limit=4
    $region2: #{tpu_custom_call.1} parent=1 // loop_pre_header
      _
    $region3: #{tpu_custom_call.1} parent=1 // loop_header
      %s17 = sphi 0, %s21
      %p18 = scmp.ge.s32.totalorder %s17, 4
      %s24 = sphi 0, %s36
      %s25 = sphi 0, %s32
      %s26 = sphi 0, %s24
      %s27 = sphi 0, %s25
      %s28 = sphi 0, %s26
      %s29 = sphi 0, %s27
      %s41 = sphi 0, %s43
      %s44 = sphi 0, %s41
      %s45 = sphi 0, %s44
      %s61 = sphi 0, %s45
      %s71 = sphi 0, %s73
      %s74 = sphi 0, %s71
      %s75 = sphi 0, %s74
      %s91 = sphi 0, %s75
      %s99 = sphi 0, %s101
      %s102 = sphi 0, %s99
      %s103 = sphi 0, %s102
      %s119 = sphi 0, %s103
    $region4: #{tpu_custom_call.1} parent=1 // loop_header_branch
      %20 = sbr.rel (%p18) target = $region8
    $region5: #{tpu_custom_call.1} parent=1 // loop_body
      %s22 = ssub.s32 %s17, 1
      %s23 = ssub.s32 %s17, 2
      %s30 = sadd.s32 1, %s25
      %p31 = scmp.ge.s32.totalorder %s30, 1
      %s32 = scalar_select %p31, 0, %s30
      %s33 = sadd.s32 1, %s24
      %s34 = scalar_select %p31, %s33, %s24
      %p35 = scmp.ge.s32.totalorder %s34, 2
      %s36 = scalar_select %p35, 0, %s34
      %s37 = ssub.s32 %s24, %s36
      %s38 = ssub.s32 %s25, %s32
      %s39 = sor.u32 %s37, %s38
      %p40 = scmp.eq.s32.totalorder %s39, 0
      %s42 = sadd.s32 %s41, 1
      %s43 = scalar_select %p40, %s41, %s42
      %p46 = pneg %p40
      %p47 = scmp.eq.s32.totalorder %s17, 1
      %p48 = por %p46, %p47
      %p49 = scmp.ne.s32.totalorder %s41, %s44
      %p50 = scmp.eq.s32.totalorder %s17, 0
      %p51 = por %p49, %p50
      %p52 = scmp.ne.s32.totalorder %s41, %s44
      %p53 = scmp.eq.s32.totalorder %s22, 1
      %p54 = por %p52, %p53
      %p55 = scmp.ne.s32.totalorder %s44, %s45
      %p56 = scmp.eq.s32.totalorder %s22, 0
      %p57 = por %p55, %p56
      %p58 = scmp.ne.s32.totalorder %s44, %s45
      %p59 = scmp.eq.s32.totalorder %s23, 1
      %p60 = por %p58, %p59
      %p62 = scmp.ne.s32.totalorder %s45, %s61
      %p63 = scmp.eq.s32.totalorder %s23, 0
      %p64 = por %p62, %p63
      %s65 = sadd.s32 %s25, 1
      %s66 = sadd.s32 %s32, 1
      %s67 = ssub.s32 %s24, %s36
      %s68 = ssub.s32 %s65, %s66
      %s69 = sor.u32 %s67, %s68
      %p70 = scmp.eq.s32.totalorder %s69, 0
      %s72 = sadd.s32 %s71, 1
      %s73 = scalar_select %p70, %s71, %s72
      %p76 = pneg %p70
      %p77 = scmp.eq.s32.totalorder %s17, 1
      %p78 = por %p76, %p77
      %p79 = scmp.ne.s32.totalorder %s71, %s74
      %p80 = scmp.eq.s32.totalorder %s17, 0
      %p81 = por %p79, %p80
      %p82 = scmp.ne.s32.totalorder %s71, %s74
      %p83 = scmp.eq.s32.totalorder %s22, 1
      %p84 = por %p82, %p83
      %p85 = scmp.ne.s32.totalorder %s74, %s75
      %p86 = scmp.eq.s32.totalorder %s22, 0
      %p87 = por %p85, %p86
      %p88 = scmp.ne.s32.totalorder %s74, %s75
      %p89 = scmp.eq.s32.totalorder %s23, 1
      %p90 = por %p88, %p89
      %p92 = scmp.ne.s32.totalorder %s75, %s91
      %p93 = scmp.eq.s32.totalorder %s23, 0
      %p94 = por %p92, %p93
      %s95 = ssub.s32 %s24, %s36
      %s96 = ssub.s32 %s25, %s32
      %s97 = sor.u32 %s95, %s96
      %p98 = scmp.eq.s32.totalorder %s97, 0
      %s100 = sadd.s32 %s99, 1
      %s101 = scalar_select %p98, %s99, %s100
      %p104 = pneg %p98
      %p105 = scmp.eq.s32.totalorder %s17, 1
      %p106 = por %p104, %p105
      %p107 = scmp.ne.s32.totalorder %s99, %s102
      %p108 = scmp.eq.s32.totalorder %s17, 0
      %p109 = por %p107, %p108
      %p110 = scmp.ne.s32.totalorder %s99, %s102
      %p111 = scmp.eq.s32.totalorder %s22, 1
      %p112 = por %p110, %p111
      %p113 = scmp.ne.s32.totalorder %s102, %s103
      %p114 = scmp.eq.s32.totalorder %s22, 0
      %p115 = por %p113, %p114
      %p116 = scmp.ne.s32.totalorder %s102, %s103
      %p117 = scmp.eq.s32.totalorder %s23, 1
      %p118 = por %p116, %p117
      %p120 = scmp.ne.s32.totalorder %s103, %s119
      %p121 = scmp.eq.s32.totalorder %s23, 0
      %p122 = por %p120, %p121
      %p123 = scmp.le.s32.totalorder 1, %s17
      %p124 = scmp.lt.s32.totalorder %s17, 3
      %p125 = pnand %p123, %p124
      %p126 = pneg %p125
      // Predicated region
      $region9: #{tpu_custom_call.1} parent=5 // pred_check
        _
      $region10: #{tpu_custom_call.1} parent=5 // pred_check_branch
        %128 = sbr.rel (%p125) target = $region12
      $region11: #{tpu_custom_call.1} parent=5 // pred_region
        %s129 = ssub.s32 %s17, 1
      $region12: #{tpu_custom_call.1} parent=5 // pred_fallthru
        _
      %p130 = scmp.lt.s32.totalorder %s17, 2
      // Predicated region
      $region13: #{tpu_custom_call.1} parent=5 // pred_check
        %p131 = pneg %p130
      $region14: #{tpu_custom_call.1} parent=5 // pred_check_branch
        %133 = sbr.rel (%p131) target = $region16
      $region15: #{tpu_custom_call.1} parent=5 // pred_region
        // Predicated region
        $region17: #{tpu_custom_call.1} parent=15 // pred_check
          %p134 = pneg %p51
        $region18: #{tpu_custom_call.1} parent=15 // pred_check_branch
          %136 = sbr.rel (%p134) target = $region20
        $region19: #{tpu_custom_call.1} parent=15 // pred_region
          %s137 = sand.u32 %s41, 1
          %s138 = scalar_lea.sflag [#allocation3], %s137
          %s139 = sand.u32 %s41, 1
          %s140 = smul.addr %s139, 8
          %s141 = scalar_lea.vmem [#allocation2], %s140
          %s142 = smul.u32 2, %s25
          %s144 = ssub.s32 128, 128
          %145 = vsyncadd %s138, %s144
          %s146 = smul.addr %s24, 4
          %s147 = sadd.s32 %s142, %s146
          %s148 = smul.addr %s147, 64
          %s149 = scalar_lea.hbm %s0, %s148
          %s151 = sshll.u32 %s141, 4
          %s152 = int_to_ptr.vmem [resolvable:$true] %s151
          %154 = dma.hbm_to_vmem [thread:$0]  %s149, 128, %s152, %s138
        $region20: #{tpu_custom_call.1} parent=15 // pred_fallthru
          _
        // Predicated region
        $region21: #{tpu_custom_call.1} parent=15 // pred_check
          %p155 = pneg %p81
        $region22: #{tpu_custom_call.1} parent=15 // pred_check_branch
          %157 = sbr.rel (%p155) target = $region24
        $region23: #{tpu_custom_call.1} parent=15 // pred_region
          %s158 = sand.u32 %s71, 1
          %s159 = scalar_lea.sflag [#allocation6], %s158
          %s160 = sand.u32 %s71, 1
          %s161 = smul.addr %s160, 8
          %s162 = scalar_lea.vmem [#allocation5], %s161
          %s163 = sadd.s32 %s25, 1
          %s164 = smul.u32 2, %s163
          %s166 = ssub.s32 128, 128
          %167 = vsyncadd %s159, %s166
          %s168 = smul.addr %s24, 4
          %s169 = sadd.s32 %s164, %s168
          %s170 = smul.addr %s169, 64
          %s171 = scalar_lea.hbm %s1, %s170
          %s173 = sshll.u32 %s162, 4
          %s174 = int_to_ptr.vmem [resolvable:$true] %s173
          %176 = dma.hbm_to_vmem [thread:$0]  %s171, 128, %s174, %s159
        $region24: #{tpu_custom_call.1} parent=15 // pred_fallthru
          _
      $region16: #{tpu_custom_call.1} parent=5 // pred_fallthru
        _
      %p177 = scmp.le.s32.totalorder 1, %s17
      %p178 = scmp.lt.s32.totalorder %s17, 3
      %p179 = pnand %p177, %p178
      %p180 = pneg %p179
      // Predicated region
      $region25: #{tpu_custom_call.1} parent=5 // pred_check
        _
      $region26: #{tpu_custom_call.1} parent=5 // pred_check_branch
        %182 = sbr.rel (%p179) target = $region28
      $region27: #{tpu_custom_call.1} parent=5 // pred_region
        %s183 = ssub.s32 %s17, 1
        %s184 = sand.u32 %s44, 1
        %s185 = scalar_lea.sflag [#allocation3], %s184
        %s186 = sand.u32 %s44, 1
        %s187 = smul.addr %s186, 8
        %s188 = scalar_lea.vmem [#allocation2], %s187
        // Predicated region
        $region29: #{tpu_custom_call.1} parent=27 // pred_check
          %p189 = pneg %p57
        $region30: #{tpu_custom_call.1} parent=27 // pred_check_branch
          %191 = sbr.rel (%p189) target = $region32
        $region31: #{tpu_custom_call.1} parent=27 // pred_region
          %192 = dma.done %s185, 128
        $region32: #{tpu_custom_call.1} parent=27 // pred_fallthru
          _
        %s193 = sand.u32 %s74, 1
        %s194 = scalar_lea.sflag [#allocation6], %s193
        %s195 = sand.u32 %s74, 1
        %s196 = smul.addr %s195, 8
        %s197 = scalar_lea.vmem [#allocation5], %s196
        // Predicated region
        $region33: #{tpu_custom_call.1} parent=27 // pred_check
          %p198 = pneg %p87
        $region34: #{tpu_custom_call.1} parent=27 // pred_check_branch
          %200 = sbr.rel (%p198) target = $region36
        $region35: #{tpu_custom_call.1} parent=27 // pred_region
          %201 = dma.done %s194, 128
        $region36: #{tpu_custom_call.1} parent=27 // pred_fallthru
          _
        %s202 = sand.u32 %s44, 1
        %s203 = scalar_lea.sflag [#allocation3], %s202
        %s204 = sand.u32 %s44, 1
        %s205 = smul.addr %s204, 8
        %s206 = scalar_lea.vmem [#allocation2], %s205
        %p207 = pneg %p57
        %p208 = pneg %p54
        %s209 = sand.u32 %s74, 1
        %s210 = scalar_lea.sflag [#allocation6], %s209
        %s211 = sand.u32 %s74, 1
        %s212 = smul.addr %s211, 8
        %s213 = scalar_lea.vmem [#allocation5], %s212
        %p214 = pneg %p87
        %p215 = pneg %p84
        %p216 = pneg %p115
        %p217 = pneg %p112
        %s218 = sand.u32 %s102, 1
        %s219 = scalar_lea.sflag [#allocation4], %s218
        %s220 = sand.u32 %s102, 1
        %s221 = smul.addr %s220, 8
        %s222 = scalar_lea.vmem [#allocation7], %s221
        %s223 = smul.u32 2, %s27
        %s224 = sadd.s32 %s27, 1
        %s225 = smul.u32 2, %s224
        %s226 = smul.u32 2, %s27
        %v227 = vld [vmem:[%s188] sm:$0xff]
        %v228 = vld [vmem:[%s197] sm:$0xff]
        %v229 = vmul.f32 %v227, %v227
        %v230 = vmul.f32 %v228, %v228
        %v231 = vadd.f32 %v229, %v230
        %232 = vst [vmem:[%s222] sm:$0xff] %v231
        %s233 = sand.u32 %s102, 1
        %s234 = scalar_lea.sflag [#allocation4], %s233
        %s235 = sand.u32 %s102, 1
        %s236 = smul.addr %s235, 8
        %s237 = scalar_lea.vmem [#allocation7], %s236
        // Predicated region
        $region37: #{tpu_custom_call.1} parent=27 // pred_check
          %p238 = pneg %p112
        $region38: #{tpu_custom_call.1} parent=27 // pred_check_branch
          %240 = sbr.rel (%p238) target = $region40
        $region39: #{tpu_custom_call.1} parent=27 // pred_region
          %s241 = smul.u32 2, %s27
          %s243 = ssub.s32 128, 128
          %244 = vsyncadd %s234, %s243
          %s245 = smul.addr %s26, 2
          %s246 = sadd.s32 %s241, %s245
          %s247 = smul.addr %s246, 64
          %s248 = scalar_lea.hbm %s2, %s247
          %s250 = sshll.u32 %s237, 4
          %s251 = int_to_ptr.vmem [resolvable:$true] %s250
          %253 = dma.vmem_to_hbm [thread:$0]  %s251, 128, %s248, %s234
        $region40: #{tpu_custom_call.1} parent=27 // pred_fallthru
          _
      $region28: #{tpu_custom_call.1} parent=5 // pred_fallthru
        _
      %p254 = scmp.le.s32.totalorder 2, %s17
      // Predicated region
      $region41: #{tpu_custom_call.1} parent=5 // pred_check
        %p255 = pneg %p254
      $region42: #{tpu_custom_call.1} parent=5 // pred_check_branch
        %257 = sbr.rel (%p255) target = $region44
      $region43: #{tpu_custom_call.1} parent=5 // pred_region
        %s258 = ssub.s32 %s17, 2
        // Predicated region
        $region45: #{tpu_custom_call.1} parent=43 // pred_check
          %p259 = pneg %p118
        $region46: #{tpu_custom_call.1} parent=43 // pred_check_branch
          %261 = sbr.rel (%p259) target = $region48
        $region47: #{tpu_custom_call.1} parent=43 // pred_region
          %s262 = sand.u32 %s103, 1
          %s263 = scalar_lea.sflag [#allocation4], %s262
          %s264 = sand.u32 %s103, 1
          %s265 = smul.addr %s264, 8
          %s266 = scalar_lea.vmem [#allocation7], %s265
          %267 = dma.done %s263, 128
        $region48: #{tpu_custom_call.1} parent=43 // pred_fallthru
          _
      $region44: #{tpu_custom_call.1} parent=5 // pred_fallthru
        _
    $region6: #{tpu_custom_call.1} parent=1 // loop_footer
      %s21 = sadd.s32 1, %s17
    $region7: #{tpu_custom_call.1} parent=1 // loop_footer_branch
      %16 = sbr.rel target = $region3
    $region8: #{tpu_custom_call.1} parent=1 // loop_exit
      _
    %268 = vsyncpa [#allocation3], 1
    %s269 = scalar_lea.sflag [#allocation3], 1
    %270 = vsyncpa %s269, 1
    %271 = vsyncpa [#allocation6], 1
    %s272 = scalar_lea.sflag [#allocation6], 1
    %273 = vsyncpa %s272, 1
    %274 = vsyncpa [#allocation4], 1
    %s275 = scalar_lea.sflag [#allocation4], 1
    %276 = vsyncpa %s275, 1

</llo_original>
